<compile_context>
chip_gen: v5e
topology: v5e:2x2
jax: 0.10.0
libtpu: 0.0.40
codegen_flags: <defaults>
</compile_context>

<pallas_src>
import functools

import jax
import jax.numpy as jnp
from jax.experimental import pallas as pl
from jax.experimental.pallas import tpu as pltpu


def _round_up(x: int, m: int) -> int:
    return (x + m - 1) // m * m


def _tcn_kernel(x_ref, w_ref, b_ref, e_ref, o_ref, acc_ref, *, inv_lout: float):
    # x_ref: (TB, TL, Cin)   w_ref: (Cin, Cout_p)   b_ref: (1, Cout_p)
    # e_ref: (TB, Cout_p)    o_ref: (TB, Cout_p)    acc_ref: (TB, Cin) f32
    li = pl.program_id(1)

    @pl.when(li == 0)
    def _init():
        acc_ref[...] = jnp.zeros_like(acc_ref)

    # Time reduction of this tile; f32 accumulation regardless of input dtype
    # (bf16 inputs stay bf16 in HBM/VMEM -> half the memory traffic).
    acc_ref[...] += jnp.sum(x_ref[...].astype(jnp.float32), axis=1)

    @pl.when(li == pl.num_programs(1) - 1)
    def _finalize():
        # One fused matmul over all taps (weights pre-summed in the wrapper).
        y = jnp.dot(acc_ref[...], w_ref[...], preferred_element_type=jnp.float32)
        y = (y - e_ref[...]) * jnp.float32(inv_lout) + b_ref[...]
        # F.normalize(p=2, dim=1): clamp the squared norm at 1e-24 == eps 1e-12.
        sq = jnp.sum(y * y, axis=1, keepdims=True)
        o_ref[...] = (y * jax.lax.rsqrt(jnp.maximum(sq, 1e-24))).astype(o_ref.dtype)


def tcn_forward(x, weight, bias, *, w: int = 1):
    """x: (B, L, Cin).  weight: (Cout, Cin, w).  bias: (Cout,)."""
    B, L, Cin = x.shape
    Cout = weight.shape[0]
    assert weight.shape == (Cout, Cin, w)
    Lout = L - w + 1
    assert Lout >= 1

    f32 = jnp.float32
    w_k = jnp.transpose(weight, (2, 1, 0)).astype(f32)      # (w, Cin, Cout)
    w_sum = jnp.sum(w_k, axis=0)                             # (Cin, Cout)

    # Edge correction: taps that do not cover the first / last (w-1) rows.
    # Tiny (2*(w-1) rows), so it is precomputed here; empty for w == 1.
    e = jnp.zeros((B, Cout), f32)
    for t in range(w - 1):                                   # prefix rows
        e = e + x[:, t, :].astype(f32) @ jnp.sum(w_k[t + 1:], axis=0)
    for t in range(Lout, L):                                 # suffix rows
        e = e + x[:, t, :].astype(f32) @ jnp.sum(w_k[:t - Lout + 1], axis=0)

    LANE, SUB = 128, 8

    # Lane-dense output: pad Cout to a multiple of 128 (zero columns do not
    # perturb the L2 norm); sliced off after the call.
    Cout_p = _round_up(Cout, LANE)

    # Sublane-dense batch tile.
    B_p = _round_up(B, SUB)
    TB = min(B_p, 128)
    B_p = _round_up(B_p, TB)

    # Time tile: ~8 MiB per x buffer (BlockSpec double-buffers) -> near-roofline
    # DMAs while staying well inside v7x's 64 MiB VMEM.
    bytes_per_row = TB * Cin * x.dtype.itemsize
    TL_cap = max(SUB, ((8 << 20) // bytes_per_row) // SUB * SUB)
    TL = min(_round_up(L, SUB), TL_cap)
    L_p = _round_up(L, TL)

    # Zero padding: padded time rows / batch rows contribute nothing to the sums.
    x_p = jnp.pad(x, ((0, B_p - B), (0, L_p - L), (0, 0)))
    w_p = jnp.pad(w_sum, ((0, 0), (0, Cout_p - Cout)))
    b_p = jnp.pad(bias.astype(f32).reshape(1, Cout), ((0, 0), (0, Cout_p - Cout)))
    e_p = jnp.pad(e, ((0, B_p - B), (0, Cout_p - Cout)))

    grid = (B_p // TB, L_p // TL)
    kernel = functools.partial(_tcn_kernel, inv_lout=1.0 / Lout)

    cost = pl.CostEstimate(
        flops=int(2 * B_p * L_p * Cin + 2 * B_p * Cin * Cout_p),
        transcendentals=int(B_p),
        bytes_accessed=int(x_p.size * x_p.dtype.itemsize
                           + (w_p.size + b_p.size + e_p.size) * 4
                           + B_p * Cout_p * x.dtype.itemsize),
    )

    out = pl.pallas_call(
        kernel,
        out_shape=jax.ShapeDtypeStruct((B_p, Cout_p), x.dtype),
        grid_spec=pltpu.PrefetchScalarGridSpec(
            num_scalar_prefetch=0,
            grid=grid,
            in_specs=[
                pl.BlockSpec((TB, TL, Cin), lambda b, l: (b, l, 0)),
                pl.BlockSpec((Cin, Cout_p), lambda b, l: (0, 0)),
                pl.BlockSpec((1, Cout_p), lambda b, l: (0, 0)),
                pl.BlockSpec((TB, Cout_p), lambda b, l: (b, 0)),
            ],
            out_specs=pl.BlockSpec((TB, Cout_p), lambda b, l: (b, 0)),
            scratch_shapes=[pltpu.VMEM((TB, Cin), jnp.float32)],
        ),
        compiler_params=pltpu.CompilerParams(
            dimension_semantics=("parallel", "arbitrary"),
            vmem_limit_bytes=48 * 1024 * 1024,
        ),
        cost_estimate=cost,
    )(x_p, w_p, b_p, e_p)

    return out[:B, :Cout]


def tcn_reference(x, weight, bias, *, w: int = 1):
    # Pure-JAX reference mirroring the PyTorch forward.
    B, L, Cin = x.shape
    Cout = weight.shape[0]
    Lout = L - w + 1
    y = jnp.zeros((B, Cout, Lout), jnp.float32)
    for k in range(w):
        y = y + jnp.einsum('bli,oi->bol', x[:, k:k + Lout, :], weight[:, :, k],
                           precision=jax.lax.Precision.HIGHEST)
    y = y + bias[None, :, None]
    m = jnp.mean(y, axis=-1)                                  # (B, Cout)
    n = jnp.sqrt(jnp.sum(m * m, axis=1, keepdims=True))
    return m / jnp.maximum(n, 1e-12)


if __name__ == "__main__":
    key = jax.random.PRNGKey(0)
    B, L = 2, 8
    inDims, outDims = 16, 32

    for w in (1, 3):   # w=1 is the module default; w=3 exercises edge handling
        kx, kw, kb = jax.random.split(jax.random.fold_in(key, w), 3)
        x = jax.random.normal(kx, (B, L, inDims), dtype=jnp.float32)

        # PyTorch Conv1d default init: U(-s, s), s = 1/sqrt(Cin*w).
        bound = 1.0 / (inDims * w) ** 0.5
        weight = jax.random.uniform(kw, (outDims, inDims, w), jnp.float32,
                                    -bound, bound)
        bias = jax.random.uniform(kb, (outDims,), jnp.float32, -bound, bound)

        out = jax.block_until_ready(tcn_forward(x, weight, bias, w=w))
        ref = tcn_reference(x, weight, bias, w=w)
        assert out.shape == (B, outDims)
        assert jnp.allclose(out, ref, atol=2e-5, rtol=2e-5), \
            f"mismatch vs reference (w={w})"

    print("KERNEL_OK")
</pallas_src>

<mosaic_0001>
module attributes {stable_mosaic.version = 11 : i64} {
  func.func @_tcn_kernel(%arg0: i32, %arg1: i32, %arg2: memref<8x8x16xf32, #tpu.memory_space<vmem>>, %arg3: memref<16x128xf32, #tpu.memory_space<vmem>>, %arg4: memref<1x128xf32, #tpu.memory_space<vmem>>, %arg5: memref<8x128xf32, #tpu.memory_space<vmem>>, %arg6: memref<8x128xf32, #tpu.memory_space<vmem>>, %arg7: memref<8x16xf32, #tpu.memory_space<vmem>>) attributes {dimension_semantics = [#tpu.dimension_semantics<parallel>, #tpu.dimension_semantics<arbitrary>], iteration_bounds = array<i64: 1, 1>, scalar_prefetch = 0 : i64, scratch_operands = 1 : i64, tpu.core_type = #tpu.core_type<tc>, window_params = [{transform_indices = @transform_0, window_bounds = array<i64: 8, 8, 16>}, {pipeline_mode = #tpu.pipeline_mode<synchronous>, transform_indices = @transform_1, window_bounds = array<i64: 16, 128>}, {pipeline_mode = #tpu.pipeline_mode<synchronous>, transform_indices = @transform_2, window_bounds = array<i64: 1, 128>}, {transform_indices = @transform_3, window_bounds = array<i64: 8, 128>}, {transform_indices = @transform_4, window_bounds = array<i64: 8, 128>}]} {
    %c0_i32 = arith.constant 0 : i32
    %0 = arith.cmpi eq, %arg1, %c0_i32 : i32
    %1 = arith.extui %0 : i1 to i32
    %c0_i32_0 = arith.constant 0 : i32
    %2 = arith.cmpi ne, %1, %c0_i32_0 : i32
    scf.if %2 {
      %cst_9 = arith.constant 0.000000e+00 : f32
      %11 = vector.broadcast %cst_9 : f32 to vector<8x16xf32>
      %c0_10 = arith.constant 0 : index
      %c0_11 = arith.constant 0 : index
      %12 = vector.load %arg7[%c0_10, %c0_11] : memref<8x16xf32, #tpu.memory_space<vmem>>, vector<8x16xf32>
      tpu.vector_store %arg7[%c0_10, %c0_11], %11 {strides = array<i32>} : memref<8x16xf32, #tpu.memory_space<vmem>>, vector<8x16xf32>,
    } else {
    }
    %c0 = arith.constant 0 : index
    %c0_1 = arith.constant 0 : index
    %3 = vector.load %arg7[%c0, %c0_1] : memref<8x16xf32, #tpu.memory_space<vmem>>, vector<8x16xf32>
    %c0_2 = arith.constant 0 : index
    %c0_3 = arith.constant 0 : index
    %c0_4 = arith.constant 0 : index
    %4 = vector.load %arg2[%c0_2, %c0_3, %c0_4] : memref<8x8x16xf32, #tpu.memory_space<vmem>>, vector<8x8x16xf32>
    %cst = arith.constant dense<0.000000e+00> : vector<8x16xf32>
    %5 = vector.multi_reduction <add>, %4, %cst [1] : vector<8x8x16xf32> to vector<8x16xf32>
    %6 = arith.addf %3, %5 : vector<8x16xf32>
    %c0_5 = arith.constant 0 : index
    %c0_6 = arith.constant 0 : index
    %7 = vector.load %arg7[%c0_5, %c0_6] : memref<8x16xf32, #tpu.memory_space<vmem>>, vector<8x16xf32>
    tpu.vector_store %arg7[%c0_5, %c0_6], %6 {strides = array<i32>} : memref<8x16xf32, #tpu.memory_space<vmem>>, vector<8x16xf32>,
    %c0_i32_7 = arith.constant 0 : i32
    %8 = arith.cmpi eq, %arg1, %c0_i32_7 : i32
    %9 = arith.extui %8 : i1 to i32
    %c0_i32_8 = arith.constant 0 : i32
    %10 = arith.cmpi ne, %9, %c0_i32_8 : i32
    scf.if %10 {
      %c0_9 = arith.constant 0 : index
      %c0_10 = arith.constant 0 : index
      %11 = vector.load %arg7[%c0_9, %c0_10] : memref<8x16xf32, #tpu.memory_space<vmem>>, vector<8x16xf32>
      %c0_11 = arith.constant 0 : index
      %c0_12 = arith.constant 0 : index
      %12 = vector.load %arg3[%c0_11, %c0_12] : memref<16x128xf32, #tpu.memory_space<vmem>>, vector<16x128xf32>
      %cst_13 = arith.constant dense<0.000000e+00> : vector<8x128xf32>
      %13 = tpu.matmul %11, %12, %cst_13 {dimension_numbers = #tpu.dot_dimension_numbers<[1], [0], [0], [1], [0, 0, 1, 1], [], []>} : vector<8x16xf32>, vector<16x128xf32>, vector<8x128xf32> -> vector<8x128xf32>
      %c0_14 = arith.constant 0 : index
      %c0_15 = arith.constant 0 : index
      %14 = vector.load %arg5[%c0_14, %c0_15] : memref<8x128xf32, #tpu.memory_space<vmem>>, vector<8x128xf32>
      %15 = arith.subf %13, %14 : vector<8x128xf32>
      %cst_16 = arith.constant 1.250000e-01 : f32
      %16 = vector.broadcast %cst_16 : f32 to vector<8x128xf32>
      %17 = arith.mulf %15, %16 : vector<8x128xf32>
      %c0_17 = arith.constant 0 : index
      %c0_18 = arith.constant 0 : index
      %18 = vector.load %arg4[%c0_17, %c0_18] : memref<1x128xf32, #tpu.memory_space<vmem>>, vector<1x128xf32>
      %19 = vector.broadcast %18 : vector<1x128xf32> to vector<8x128xf32>
      %20 = arith.addf %17, %19 : vector<8x128xf32>
      %21 = arith.mulf %20, %20 : vector<8x128xf32>
      %cst_19 = arith.constant dense<0.000000e+00> : vector<8xf32>
      %22 = vector.multi_reduction <add>, %21, %cst_19 [1] : vector<8x128xf32> to vector<8xf32>
      %23 = vector.shape_cast %22 : vector<8xf32> to vector<8x1xf32>
      %cst_20 = arith.constant 1.000000e-24 : f32
      %24 = vector.broadcast %cst_20 : f32 to vector<8x1xf32>
      %25 = arith.maximumf %23, %24 : vector<8x1xf32>
      %26 = math.rsqrt %25 : vector<8x1xf32>
      %27 = vector.broadcast %26 : vector<8x1xf32> to vector<8x128xf32>
      %28 = arith.mulf %20, %27 : vector<8x128xf32>
      %c0_21 = arith.constant 0 : index
      %c0_22 = arith.constant 0 : index
      %29 = vector.load %arg6[%c0_21, %c0_22] : memref<8x128xf32, #tpu.memory_space<vmem>>, vector<8x128xf32>
      tpu.vector_store %arg6[%c0_21, %c0_22], %28 {strides = array<i32>} : memref<8x128xf32, #tpu.memory_space<vmem>>, vector<8x128xf32>,
    } else {
    }
    return
  }
  func.func @transform_0(%arg0: i32, %arg1: i32) -> (i32, i32, i32) {
    %c0_i32 = arith.constant 0 : i32
    %c0_i32_0 = arith.constant 0 : i32
    return %arg0, %arg1, %c0_i32 : i32, i32, i32
  }
  func.func @transform_1(%arg0: i32, %arg1: i32) -> (i32, i32) {
    %c0_i32 = arith.constant 0 : i32
    %c0_i32_0 = arith.constant 0 : i32
    %c0_i32_1 = arith.constant 0 : i32
    return %c0_i32, %c0_i32_0 : i32, i32
  }
  func.func @transform_2(%arg0: i32, %arg1: i32) -> (i32, i32) {
    %c0_i32 = arith.constant 0 : i32
    %c0_i32_0 = arith.constant 0 : i32
    %c0_i32_1 = arith.constant 0 : i32
    return %c0_i32, %c0_i32_0 : i32, i32
  }
  func.func @transform_3(%arg0: i32, %arg1: i32) -> (i32, i32) {
    %c0_i32 = arith.constant 0 : i32
    %c0_i32_0 = arith.constant 0 : i32
    return %arg0, %c0_i32 : i32, i32
  }
  func.func @transform_4(%arg0: i32, %arg1: i32) -> (i32, i32) {
    %c0_i32 = arith.constant 0 : i32
    %c0_i32_0 = arith.constant 0 : i32
    return %arg0, %c0_i32 : i32, i32
  }
}

</mosaic_0001>

<llo_original>
// kernel: tpu_custom_call.1
$region0: #{tpu_custom_call.1}
  #allocation0 [shape = 'u32[]', space=smem, size = 0x4, offset = 0x4, fixed_abs, tag = 'smem constant byte address 0x4 - core index']
  #allocation1 [shape = 'u32[72,128]{1,0:T(1,128)}', space=vmem, size = 0x9000, scoped, tag = 'internal scratch']
  #allocation2 [shape = 'f32[8,16]{1,0:T(8,128)}', space=vmem, size = 0x1000, scoped, tag = 'scratch operand']
  %s0 = inlined_call_operand.hbm [shape: f32[8,8,16], index: 0, kind: input, shape index: {}]
  %s1 = inlined_call_operand.hbm [shape: f32[16,128], index: 1, kind: input, shape index: {}]
  %s2 = inlined_call_operand.vmem [shape: f32[1,128], index: 2, kind: input, shape index: {}]
  %s3 = inlined_call_operand.hbm [shape: f32[8,128], index: 3, kind: input, shape index: {}]
  %s4 = inlined_call_operand.hbm [shape: f32[8,128], index: 4, kind: output, shape index: {}]
  %s5 = sld [smem:[#allocation0]]
  $region46: #{tpu_custom_call.1} parent=0
    _
  %s7 = ssub.s32 1, %s5
  %s8 = scalar_select 0, %s7, %s5
  $region1: #{tpu_custom_call.1} parent=0
    #allocation3 [shape = 'u8[32768]{0}', space=vmem, size = 0x8000, scoped, tag = 'input window, operand 0, single buffered']
    #allocation4 [shape = 's32[1]{0}', space=sflag, size = 0x4, scoped, tag = 'scoped memory for tpu_custom_call.1']
    #allocation5 [shape = 's32[1]{0}', space=sflag, size = 0x4, scoped, tag = 'scoped memory for tpu_custom_call.1']
    #allocation6 [shape = 'u8[8192]{0}', space=vmem, size = 0x2000, scoped, tag = 'input window, operand 1, single buffered']
    #allocation7 [shape = 's32[1]{0}', space=sflag, size = 0x4, scoped, tag = 'scoped memory for tpu_custom_call.1']
    #allocation8 [shape = 'u8[4096]{0}', space=vmem, size = 0x1000, scoped, tag = 'input window, operand 3, single buffered']
    #allocation9 [shape = 'u8[4096]{0}', space=vmem, size = 0x1000, scoped, tag = 'output window, operand 0, single buffered']
    %9 = vsyncpa [#allocation4], 0
    %10 = vsyncpa [#allocation7], 0
    %11 = vsyncpa [#allocation5], 0
    // Predicated region
    $region2: #{tpu_custom_call.1} parent=1 // pred_check
      _
    $region3: #{tpu_custom_call.1} parent=1 // pred_check_branch
      %13 = sbr.rel (0) target = $region5
    $region4: #{tpu_custom_call.1} parent=1 // pred_region
      %15 = vsyncadd [#allocation4], 0
      %s16 = sshll.u32 %s0, 4
      %s17 = int_to_ptr.hbm [resolvable:$true] %s16
      %s18 = sshll.u32 [#allocation3], 4
      %s19 = int_to_ptr.vmem [resolvable:$true] %s18
      %24 = dma.hbm_to_vmem [thread:$0]  %s17, 1024, %s19, [#allocation4], 128, 128, 8
    $region5: #{tpu_custom_call.1} parent=1 // pred_fallthru
      _
    // Predicated region
    $region6: #{tpu_custom_call.1} parent=1 // pred_check
      _
    $region7: #{tpu_custom_call.1} parent=1 // pred_check_branch
      %26 = sbr.rel (0) target = $region9
    $region8: #{tpu_custom_call.1} parent=1 // pred_region
      %28 = vsyncadd [#allocation7], 0
      %s29 = sshll.u32 %s1, 4
      %s30 = int_to_ptr.hbm [resolvable:$true] %s29
      %s31 = sshll.u32 [#allocation6], 4
      %s32 = int_to_ptr.vmem [resolvable:$true] %s31
      %37 = dma.hbm_to_vmem [thread:$0]  %s30, 256, %s32, [#allocation7], 128, 128, 8
    $region9: #{tpu_custom_call.1} parent=1 // pred_fallthru
      _
    // Predicated region
    $region10: #{tpu_custom_call.1} parent=1 // pred_check
      _
    $region11: #{tpu_custom_call.1} parent=1 // pred_check_branch
      %39 = sbr.rel (0) target = $region13
    $region12: #{tpu_custom_call.1} parent=1 // pred_region
      _
    $region13: #{tpu_custom_call.1} parent=1 // pred_fallthru
      _
    // Predicated region
    $region14: #{tpu_custom_call.1} parent=1 // pred_check
      _
    $region15: #{tpu_custom_call.1} parent=1 // pred_check_branch
      %41 = sbr.rel (0) target = $region17
    $region16: #{tpu_custom_call.1} parent=1 // pred_region
      %43 = vsyncadd [#allocation7], 0
      %s45 = sshll.u32 %s3, 4
      %s46 = int_to_ptr.hbm [resolvable:$true] %s45
      %s47 = sshll.u32 [#allocation8], 4
      %s48 = int_to_ptr.vmem [resolvable:$true] %s47
      %50 = dma.hbm_to_vmem [thread:$0]  %s46, 128, %s48, [#allocation7]
    $region17: #{tpu_custom_call.1} parent=1 // pred_fallthru
      _
    // Predicated region
    $region18: #{tpu_custom_call.1} parent=1 // pred_check
      _
    $region19: #{tpu_custom_call.1} parent=1 // pred_check_branch
      %52 = sbr.rel (0) target = $region21
    $region20: #{tpu_custom_call.1} parent=1 // pred_region
      %54 = dma.done [#allocation4], 1024
    $region21: #{tpu_custom_call.1} parent=1 // pred_fallthru
      _
    // Predicated region
    $region22: #{tpu_custom_call.1} parent=1 // pred_check
      _
    $region23: #{tpu_custom_call.1} parent=1 // pred_check_branch
      %56 = sbr.rel (0) target = $region25
    $region24: #{tpu_custom_call.1} parent=1 // pred_region
      %58 = dma.done [#allocation7], 256
    $region25: #{tpu_custom_call.1} parent=1 // pred_fallthru
      _
    // Predicated region
    $region26: #{tpu_custom_call.1} parent=1 // pred_check
      _
    $region27: #{tpu_custom_call.1} parent=1 // pred_check_branch
      %60 = sbr.rel (0) target = $region29
    $region28: #{tpu_custom_call.1} parent=1 // pred_region
      %62 = dma.done [#allocation7], 128
    $region29: #{tpu_custom_call.1} parent=1 // pred_fallthru
      _
    %p63 = scmp.eq.s32.totalorder 0, 0
    // Predicated region
    $region30: #{tpu_custom_call.1} parent=1 // pred_check
      %p64 = pneg %p63
    $region31: #{tpu_custom_call.1} parent=1 // pred_check_branch
      %66 = sbr.rel (%p64) target = $region33
    $region32: #{tpu_custom_call.1} parent=1 // pred_region
      %vm67 = vcmask 130048
      %68 = vst.msk [vmem:[#allocation2] sm:$0xff] %vm67, 0.0
    $region33: #{tpu_custom_call.1} parent=1 // pred_fallthru
      _
    %v69 = vld [vmem:[#allocation2] sm:$0xff]
    %v70 = vld [vmem:[#allocation3] sm:$0xff]
    %v71 = vld [vmem:[#allocation3 + $0x8] sm:$0xff]
    %v72 = vld [vmem:[#allocation3 + $0x10] sm:$0xff]
    %v73 = vld [vmem:[#allocation3 + $0x18] sm:$0xff]
    %v74 = vld [vmem:[#allocation3 + $0x20] sm:$0xff]
    %v75 = vld [vmem:[#allocation3 + $0x28] sm:$0xff]
    %v76 = vld [vmem:[#allocation3 + $0x30] sm:$0xff]
    %v77 = vld [vmem:[#allocation3 + $0x38] sm:$0xff]
    %vm78 = vcmask 130048
    %v79 = vsel %vm78, %v70, 0.0
    %v80 = vrot.slane %v79, 4
    %v81 = vadd.f32 %v79, %v80
    %v82 = vrot.slane %v81, 2
    %v83 = vadd.f32 %v81, %v82
    %v84 = vrot.slane %v83, 1
    %v85 = vadd.f32 %v83, %v84
    %v86 = vsel %vm78, %v71, 0.0
    %v87 = vrot.slane %v86, 4
    %v88 = vadd.f32 %v86, %v87
    %v89 = vrot.slane %v88, 2
    %v90 = vadd.f32 %v88, %v89
    %v91 = vrot.slane %v90, 1
    %v92 = vadd.f32 %v90, %v91
    %v93 = vsel %vm78, %v72, 0.0
    %v94 = vrot.slane %v93, 4
    %v95 = vadd.f32 %v93, %v94
    %v96 = vrot.slane %v95, 2
    %v97 = vadd.f32 %v95, %v96
    %v98 = vrot.slane %v97, 1
    %v99 = vadd.f32 %v97, %v98
    %v100 = vsel %vm78, %v73, 0.0
    %v101 = vrot.slane %v100, 4
    %v102 = vadd.f32 %v100, %v101
    %v103 = vrot.slane %v102, 2
    %v104 = vadd.f32 %v102, %v103
    %v105 = vrot.slane %v104, 1
    %v106 = vadd.f32 %v104, %v105
    %v107 = vsel %vm78, %v74, 0.0
    %v108 = vrot.slane %v107, 4
    %v109 = vadd.f32 %v107, %v108
    %v110 = vrot.slane %v109, 2
    %v111 = vadd.f32 %v109, %v110
    %v112 = vrot.slane %v111, 1
    %v113 = vadd.f32 %v111, %v112
    %v114 = vsel %vm78, %v75, 0.0
    %v115 = vrot.slane %v114, 4
    %v116 = vadd.f32 %v114, %v115
    %v117 = vrot.slane %v116, 2
    %v118 = vadd.f32 %v116, %v117
    %v119 = vrot.slane %v118, 1
    %v120 = vadd.f32 %v118, %v119
    %v121 = vsel %vm78, %v76, 0.0
    %v122 = vrot.slane %v121, 4
    %v123 = vadd.f32 %v121, %v122
    %v124 = vrot.slane %v123, 2
    %v125 = vadd.f32 %v123, %v124
    %v126 = vrot.slane %v125, 1
    %v127 = vadd.f32 %v125, %v126
    %v128 = vsel %vm78, %v77, 0.0
    %v129 = vrot.slane %v128, 4
    %v130 = vadd.f32 %v128, %v129
    %v131 = vrot.slane %v130, 2
    %v132 = vadd.f32 %v130, %v131
    %v133 = vrot.slane %v132, 1
    %v134 = vadd.f32 %v132, %v133
    %vm143 = vcmask 1041409
    %v144 = vsel %vm143, %v92, %v85
    %vm145 = vcmask 1042434
    %v146 = vsel %vm145, %v99, %v144
    %vm147 = vcmask 1043459
    %v148 = vsel %vm147, %v106, %v146
    %vm149 = vcmask 1044484
    %v150 = vsel %vm149, %v113, %v148
    %vm151 = vcmask 1045509
    %v152 = vsel %vm151, %v120, %v150
    %vm153 = vcmask 1046534
    %v154 = vsel %vm153, %v127, %v152
    %vm155 = vcmask 1047559
    %v156 = vsel %vm155, %v134, %v154
    %v158 = vadd.f32 %v69, %v156
    %159 = vst.msk [vmem:[#allocation2] sm:$0xff] %vm78, %v158
    // Predicated region
    $region34: #{tpu_custom_call.1} parent=1 // pred_check
      %p160 = pneg %p63
    $region35: #{tpu_custom_call.1} parent=1 // pred_check_branch
      %162 = sbr.rel (%p160) target = $region37
    $region36: #{tpu_custom_call.1} parent=1 // pred_region
      %v163 = vld [vmem:[#allocation2] sm:$0xff]
      %v164 = vld [vmem:[#allocation6] sm:$0xff]
      %v165 = vld [vmem:[#allocation6 + $0x8] sm:$0xff]
      %v167 = vsel %vm78, %v163, 0
      %169 = vmatpush.msra.mxu0 0.0
      %170 = vmatpush.msra.mxu0 0.0
      %171 = vmatpush.msra.mxu0 0.0
      %172 = vmatpush.msra.mxu0 0.0
      %173 = vmatpush.msra.mxu0 0.0
      %174 = vmatpush.msra.mxu0 0.0
      %175 = vmatpush.msra.mxu0 0.0
      %176 = vmatpush.msra.mxu0 0.0
      %177 = vmatpush.msra.mxu0 0.0
      %178 = vmatpush.msra.mxu0 0.0
      %179 = vmatpush.msra.mxu0 0.0
      %180 = vmatpush.msra.mxu0 0.0
      %181 = vmatpush.msra.mxu0 0.0
      %182 = vmatpush.msra.mxu0 0.0
      %183 = vmatpush.msra.mxu0 %v165
      %184 = vmatpush.msra.mxu0 %v164
      %185 = vmatmul.f32.gmra.mxu0 %v167
      %v186 = vpop.f32.mrf.mxu0
      %v187 = vadd.f32 0.0, %v186
      %188 = vdwg.mxu0
      %v189 = vld [vmem:[#allocation8] sm:$0xff]
      %v190 = vsub.f32 %v187, %v189
      %v191 = vmul.f32 %v190, 0.125
      %v192 = vld [vmem:[%s2] sm:$0x1]
      %v194 = vperm.slane %v192, 0
      %v196 = vadd.f32 %v191, %v194
      %v197 = vmul.f32 %v196, %v196
      %198 = vadd.xlane.f32.xlu0 %v197
      %v199 = vpop.xlane.xlu0 %198
      %v200 = vmax.f32 %v199, 1e-24
      %v201 = vrsqrt.pop %v200
      %v202 = vmul.f32 %v201, %v200
      %v203 = vmul.f32 %v202, %v201
      %v204 = vmul.f32 0.5, %v203
      %v205 = vsub.f32 1.5, %v204
      %v206 = vmul.f32 %v201, %v205
      %vm207 = vweird.f32 %v200
      %vm208 = vweird.f32 %v201
      %vm209 = vmor %vm207, %vm208
      %v210 = vsel %vm209, %v201, %v206
      %v211 = vmul.f32 %v196, %v210
      %212 = vst [vmem:[#allocation9] sm:$0xff] %v211
    $region37: #{tpu_custom_call.1} parent=1 // pred_fallthru
      _
    // Predicated region
    $region38: #{tpu_custom_call.1} parent=1 // pred_check
      _
    $region39: #{tpu_custom_call.1} parent=1 // pred_check_branch
      %214 = sbr.rel (0) target = $region41
    $region40: #{tpu_custom_call.1} parent=1 // pred_region
      %216 = vsyncadd [#allocation5], 0
      %s218 = sshll.u32 [#allocation9], 4
      %s219 = int_to_ptr.vmem [resolvable:$true] %s218
      %s220 = sshll.u32 %s4, 4
      %s221 = int_to_ptr.hbm [resolvable:$true] %s220
      %223 = dma.vmem_to_hbm [thread:$0]  %s219, 128, %s221, [#allocation5]
    $region41: #{tpu_custom_call.1} parent=1 // pred_fallthru
      _
    // Predicated region
    $region42: #{tpu_custom_call.1} parent=1 // pred_check
      _
    $region43: #{tpu_custom_call.1} parent=1 // pred_check_branch
      %225 = sbr.rel (0) target = $region45
    $region44: #{tpu_custom_call.1} parent=1 // pred_region
      %227 = dma.done [#allocation5], 128
    $region45: #{tpu_custom_call.1} parent=1 // pred_fallthru
      _
    %228 = vsyncpa [#allocation4], 1
    %229 = vsyncpa [#allocation7], 1
    %230 = vsyncpa [#allocation5], 1

</llo_original>
